<compile_context>
chip_gen: v5e
topology: v5e:2x2
jax: 0.10.0
libtpu: 0.0.40
codegen_flags: <defaults>
</compile_context>

<pallas_src>
import functools

import jax
import jax.numpy as jnp
from jax.experimental import pallas as pl
from jax.experimental.pallas import tpu as pltpu

MIN_SCALE = 0.01
MAX_SCALE = 20.0


def _round_up(x, m):
    return (x + m - 1) // m * m


def _mvn_diag_kernel(x_ref, w1_ref, b1_ref, w2_ref, b2_ref, w3_ref, b3_ref,
                     out_ref, *, latent, min_scale, max_scale, apply_softplus):
    cd = w1_ref.dtype  # MXU compute dtype (bf16 by default)
    # dense1 + ReLU (MXU in compute dtype, f32 accumulation, f32 elementwise)
    h = jnp.dot(x_ref[...], w1_ref[...], preferred_element_type=jnp.float32)
    h = jnp.maximum(h + b1_ref[...], 0.0)
    # dense2 + ReLU
    h = jnp.dot(h.astype(cd), w2_ref[...], preferred_element_type=jnp.float32)
    h = jnp.maximum(h + b2_ref[...], 0.0)
    # out layer: one fused matmul into the lane-dense 128-padded slab
    out = jnp.dot(h.astype(cd), w3_ref[...], preferred_element_type=jnp.float32)
    out = out + b3_ref[...]
    if apply_softplus:
        # numerically-stable softplus + clamp, applied only to the logscale
        # half of the slab (columns [latent, 2*latent)) via a lane mask.
        sp = jnp.maximum(out, 0.0) + jnp.log1p(jnp.exp(-jnp.abs(out)))
        scale = jnp.clip(sp, min_scale, max_scale)
        col = jax.lax.broadcasted_iota(jnp.int32, out.shape, 1)
        is_scale = jnp.logical_and(col >= latent, col < 2 * latent)
        out = jnp.where(is_scale, scale, out)
    out_ref[...] = out


def multivariate_normal_diag_forward(x, params, *, fixed_scale=None,
                                     min_scale=MIN_SCALE, max_scale=MAX_SCALE,
                                     compute_dtype=jnp.bfloat16,
                                     block_batch=512):
    """Pallas forward of MultivariateNormalDiag.

    Returns (loc, scale) where `scale` is the covariance diagonal, mirroring
    MultivariateNormal(loc, covariance_matrix=diag_embed(scale)) in the torch
    module.  The dense covariance is deliberately NOT materialized here; use
    `diag_embed(scale)` only when a downstream op needs the dense matrix.
    """
    w1, b1, w2, b2, w3, b3 = params
    B, in_width = x.shape
    base_depth = w1.shape[1]
    out_width = w3.shape[1]
    latent = out_width // 2 if fixed_scale is None else out_width

    # --- pad the out-layer to a lane-dense (multiple-of-128) slab -----------
    padded_out = max(128, _round_up(out_width, 128))
    w3p = jnp.zeros((base_depth, padded_out), w3.dtype).at[:, :out_width].set(w3)
    b3p = jnp.zeros((padded_out,), b3.dtype).at[:out_width].set(b3)

    # --- batch tiling: "parallel" grid axis, weights stay resident ----------
    bm = min(_round_up(B, 8), block_batch)
    B_pad = _round_up(B, bm)
    if B_pad != B:
        x = jnp.pad(x, ((0, B_pad - B), (0, 0)))
    grid = (B_pad // bm,)

    # --- dtypes: bf16 through the MXU, f32 bias / activation / softplus -----
    x_c = x.astype(compute_dtype)
    w1_c = w1.astype(compute_dtype)
    w2_c = w2.astype(compute_dtype)
    w3_c = w3p.astype(compute_dtype)
    b1_2d = b1.reshape(1, base_depth).astype(jnp.float32)
    b2_2d = b2.reshape(1, base_depth).astype(jnp.float32)
    b3_2d = b3p.reshape(1, padded_out).astype(jnp.float32)

    kernel = functools.partial(
        _mvn_diag_kernel, latent=latent, min_scale=float(min_scale),
        max_scale=float(max_scale), apply_softplus=fixed_scale is None)

    const = lambda shape: pl.BlockSpec(shape, lambda i: (0, 0))

    itemsize_c = jnp.dtype(compute_dtype).itemsize
    flops = 2 * B_pad * (in_width * base_depth
                         + base_depth * base_depth
                         + base_depth * padded_out)
    transcendentals = 2 * B_pad * padded_out if fixed_scale is None else 0
    bytes_accessed = (x_c.size * itemsize_c
                      + (w1_c.size + w2_c.size + w3_c.size) * itemsize_c
                      + (b1_2d.size + b2_2d.size + b3_2d.size) * 4
                      + B_pad * padded_out * 4)

    out = pl.pallas_call(
        kernel,
        out_shape=jax.ShapeDtypeStruct((B_pad, padded_out), jnp.float32),
        grid=grid,
        in_specs=[
            pl.BlockSpec((bm, in_width), lambda i: (i, 0)),
            const((in_width, base_depth)), const((1, base_depth)),
            const((base_depth, base_depth)), const((1, base_depth)),
            const((base_depth, padded_out)), const((1, padded_out)),
        ],
        out_specs=pl.BlockSpec((bm, padded_out), lambda i: (i, 0)),
        compiler_params=pltpu.CompilerParams(
            dimension_semantics=("parallel",)),
        cost_estimate=pl.CostEstimate(
            flops=flops, transcendentals=transcendentals,
            bytes_accessed=bytes_accessed),
    )(x_c, w1_c, b1_2d, w2_c, b2_2d, w3_c, b3_2d)

    loc = out[:B, :latent]
    if fixed_scale is None:
        scale = out[:B, latent:2 * latent]
    else:
        # fixed-scale branch: out layer only produces loc; scale is the
        # user-supplied constant (mirrors `scale = self._scale` in torch).
        scale = fixed_scale
    return loc, scale


def diag_embed(scale):
    """Dense diagonal covariance via scatter-to-diagonal (call only if needed)."""
    n = scale.shape[-1]
    idx = jnp.arange(n)
    return jnp.zeros(scale.shape + (n,), scale.dtype).at[..., idx, idx].set(scale)


def init_params(key, in_width, base_depth, latent_size):
    """Deterministic synthetic parameters (torch Linear shapes, transposed)."""
    out_width = 2 * latent_size  # scale=None branch
    k1, k2, k3, k4, k5, k6 = jax.random.split(key, 6)
    w1 = jax.random.normal(k1, (in_width, base_depth), jnp.float32) * (1.0 / jnp.sqrt(in_width))
    b1 = jax.random.normal(k2, (base_depth,), jnp.float32) * 0.01
    w2 = jax.random.normal(k3, (base_depth, base_depth), jnp.float32) * (1.0 / jnp.sqrt(base_depth))
    b2 = jax.random.normal(k4, (base_depth,), jnp.float32) * 0.01
    w3 = jax.random.normal(k5, (base_depth, out_width), jnp.float32) * (1.0 / jnp.sqrt(base_depth))
    b3 = jax.random.normal(k6, (out_width,), jnp.float32) * 0.01
    return (w1, b1, w2, b2, w3, b3)


def _reference(x, params, *, min_scale=MIN_SCALE, max_scale=MAX_SCALE,
               compute_dtype=jnp.bfloat16):
    """Pure-JAX reference mirroring the kernel's dtype policy."""
    w1, b1, w2, b2, w3, b3 = params
    cd = compute_dtype
    h = jnp.dot(x.astype(cd), w1.astype(cd),
                preferred_element_type=jnp.float32) + b1
    h = jnp.maximum(h, 0.0)
    h = jnp.dot(h.astype(cd), w2.astype(cd),
                preferred_element_type=jnp.float32) + b2
    h = jnp.maximum(h, 0.0)
    out = jnp.dot(h.astype(cd), w3.astype(cd),
                  preferred_element_type=jnp.float32) + b3
    loc, logscale = jnp.split(out, 2, axis=-1)
    scale = jnp.clip(jax.nn.softplus(logscale), min_scale, max_scale)
    return loc, scale


if __name__ == "__main__":
    in_width, base_depth, latent_size, batch = 32, 32, 16, 8

    key = jax.random.PRNGKey(0)
    pkey, xkey = jax.random.split(key)
    params = init_params(pkey, in_width, base_depth, latent_size)
    x = jax.random.normal(xkey, (batch, in_width), jnp.float32)

    loc, scale = multivariate_normal_diag_forward(x, params)
    jax.block_until_ready((loc, scale))

    loc_ref, scale_ref = _reference(x, params)
    assert loc.shape == (batch, latent_size)
    assert scale.shape == (batch, latent_size)
    assert jnp.allclose(loc, loc_ref, atol=1e-4, rtol=1e-4), \
        float(jnp.max(jnp.abs(loc - loc_ref)))
    assert jnp.allclose(scale, scale_ref, atol=1e-4, rtol=1e-4), \
        float(jnp.max(jnp.abs(scale - scale_ref)))
    assert bool(jnp.all(scale >= MIN_SCALE)) and bool(jnp.all(scale <= MAX_SCALE))

    # Dense covariance only when explicitly requested (kept out of the hot path).
    cov = diag_embed(scale)
    assert cov.shape == (batch, latent_size, latent_size)

    print("KERNEL_OK")
</pallas_src>

<mosaic_0001>
module attributes {stable_mosaic.version = 11 : i64} {
  func.func @_mvn_diag_kernel(%arg0: i32, %arg1: memref<8x32xbf16, #tpu.memory_space<vmem>>, %arg2: memref<32x32xbf16, #tpu.memory_space<vmem>>, %arg3: memref<1x32xf32, #tpu.memory_space<vmem>>, %arg4: memref<32x32xbf16, #tpu.memory_space<vmem>>, %arg5: memref<1x32xf32, #tpu.memory_space<vmem>>, %arg6: memref<32x128xbf16, #tpu.memory_space<vmem>>, %arg7: memref<1x128xf32, #tpu.memory_space<vmem>>, %arg8: memref<8x128xf32, #tpu.memory_space<vmem>>) attributes {dimension_semantics = [#tpu.dimension_semantics<parallel>], iteration_bounds = array<i64: 1>, scalar_prefetch = 0 : i64, scratch_operands = 0 : i64, tpu.core_type = #tpu.core_type<tc>, window_params = [{transform_indices = @transform_0, window_bounds = array<i64: 8, 32>}, {pipeline_mode = #tpu.pipeline_mode<synchronous>, transform_indices = @transform_1, window_bounds = array<i64: 32, 32>}, {pipeline_mode = #tpu.pipeline_mode<synchronous>, transform_indices = @transform_2, window_bounds = array<i64: 1, 32>}, {pipeline_mode = #tpu.pipeline_mode<synchronous>, transform_indices = @transform_3, window_bounds = array<i64: 32, 32>}, {pipeline_mode = #tpu.pipeline_mode<synchronous>, transform_indices = @transform_4, window_bounds = array<i64: 1, 32>}, {pipeline_mode = #tpu.pipeline_mode<synchronous>, transform_indices = @transform_5, window_bounds = array<i64: 32, 128>}, {pipeline_mode = #tpu.pipeline_mode<synchronous>, transform_indices = @transform_6, window_bounds = array<i64: 1, 128>}, {transform_indices = @transform_7, window_bounds = array<i64: 8, 128>}]} {
    %c0 = arith.constant 0 : index
    %c0_0 = arith.constant 0 : index
    %0 = vector.load %arg1[%c0, %c0_0] : memref<8x32xbf16, #tpu.memory_space<vmem>>, vector<8x32xbf16>
    %c0_1 = arith.constant 0 : index
    %c0_2 = arith.constant 0 : index
    %1 = vector.load %arg2[%c0_1, %c0_2] : memref<32x32xbf16, #tpu.memory_space<vmem>>, vector<32x32xbf16>
    %cst = arith.constant dense<0.000000e+00> : vector<8x32xf32>
    %2 = tpu.matmul %0, %1, %cst {dimension_numbers = #tpu.dot_dimension_numbers<[1], [0], [0], [1], [0, 0, 1, 1], [], []>} : vector<8x32xbf16>, vector<32x32xbf16>, vector<8x32xf32> -> vector<8x32xf32>
    %c0_3 = arith.constant 0 : index
    %c0_4 = arith.constant 0 : index
    %3 = vector.load %arg3[%c0_3, %c0_4] : memref<1x32xf32, #tpu.memory_space<vmem>>, vector<1x32xf32>
    %4 = vector.broadcast %3 : vector<1x32xf32> to vector<8x32xf32>
    %5 = arith.addf %2, %4 : vector<8x32xf32>
    %cst_5 = arith.constant 0.000000e+00 : f32
    %6 = vector.broadcast %cst_5 : f32 to vector<8x32xf32>
    %7 = arith.maximumf %5, %6 : vector<8x32xf32>
    %8 = arith.truncf %7 : vector<8x32xf32> to vector<8x32xbf16>
    %c0_6 = arith.constant 0 : index
    %c0_7 = arith.constant 0 : index
    %9 = vector.load %arg4[%c0_6, %c0_7] : memref<32x32xbf16, #tpu.memory_space<vmem>>, vector<32x32xbf16>
    %cst_8 = arith.constant dense<0.000000e+00> : vector<8x32xf32>
    %10 = tpu.matmul %8, %9, %cst_8 {dimension_numbers = #tpu.dot_dimension_numbers<[1], [0], [0], [1], [0, 0, 1, 1], [], []>} : vector<8x32xbf16>, vector<32x32xbf16>, vector<8x32xf32> -> vector<8x32xf32>
    %c0_9 = arith.constant 0 : index
    %c0_10 = arith.constant 0 : index
    %11 = vector.load %arg5[%c0_9, %c0_10] : memref<1x32xf32, #tpu.memory_space<vmem>>, vector<1x32xf32>
    %12 = vector.broadcast %11 : vector<1x32xf32> to vector<8x32xf32>
    %13 = arith.addf %10, %12 : vector<8x32xf32>
    %cst_11 = arith.constant 0.000000e+00 : f32
    %14 = vector.broadcast %cst_11 : f32 to vector<8x32xf32>
    %15 = arith.maximumf %13, %14 : vector<8x32xf32>
    %16 = arith.truncf %15 : vector<8x32xf32> to vector<8x32xbf16>
    %c0_12 = arith.constant 0 : index
    %c0_13 = arith.constant 0 : index
    %17 = vector.load %arg6[%c0_12, %c0_13] : memref<32x128xbf16, #tpu.memory_space<vmem>>, vector<32x128xbf16>
    %cst_14 = arith.constant dense<0.000000e+00> : vector<8x128xf32>
    %18 = tpu.matmul %16, %17, %cst_14 {dimension_numbers = #tpu.dot_dimension_numbers<[1], [0], [0], [1], [0, 0, 1, 1], [], []>} : vector<8x32xbf16>, vector<32x128xbf16>, vector<8x128xf32> -> vector<8x128xf32>
    %c0_15 = arith.constant 0 : index
    %c0_16 = arith.constant 0 : index
    %19 = vector.load %arg7[%c0_15, %c0_16] : memref<1x128xf32, #tpu.memory_space<vmem>>, vector<1x128xf32>
    %20 = vector.broadcast %19 : vector<1x128xf32> to vector<8x128xf32>
    %21 = arith.addf %18, %20 : vector<8x128xf32>
    %cst_17 = arith.constant 0.000000e+00 : f32
    %22 = vector.broadcast %cst_17 : f32 to vector<8x128xf32>
    %23 = arith.maximumf %21, %22 : vector<8x128xf32>
    %24 = math.absf %21 : vector<8x128xf32>
    %cst_18 = arith.constant 0.000000e+00 : f32
    %25 = vector.broadcast %cst_18 : f32 to vector<8x128xf32>
    %26 = arith.subf %25, %24 : vector<8x128xf32>
    %27 = math.exp %26 : vector<8x128xf32>
    %28 = math.log1p %27 : vector<8x128xf32>
    %29 = arith.addf %23, %28 : vector<8x128xf32>
    %cst_19 = arith.constant 0.00999999977 : f32
    %cst_20 = arith.constant 2.000000e+01 : f32
    %30 = vector.broadcast %cst_19 : f32 to vector<8x128xf32>
    %31 = arith.maximumf %30, %29 : vector<8x128xf32>
    %32 = vector.broadcast %cst_20 : f32 to vector<8x128xf32>
    %33 = arith.minimumf %32, %31 : vector<8x128xf32>
    %34 = tpu.iota {dimensions = array<i32: 1>} : vector<8x128xi32>
    %c16_i32 = arith.constant 16 : i32
    %35 = vector.broadcast %c16_i32 : i32 to vector<8x128xi32>
    %36 = arith.cmpi sge, %34, %35 : vector<8x128xi32>
    %c32_i32 = arith.constant 32 : i32
    %37 = vector.broadcast %c32_i32 : i32 to vector<8x128xi32>
    %38 = arith.cmpi slt, %34, %37 : vector<8x128xi32>
    %39 = arith.andi %36, %38 : vector<8x128xi1>
    %40 = arith.select %39, %33, %21 : vector<8x128xi1>, vector<8x128xf32>
    %c0_21 = arith.constant 0 : index
    %c0_22 = arith.constant 0 : index
    %41 = vector.load %arg8[%c0_21, %c0_22] : memref<8x128xf32, #tpu.memory_space<vmem>>, vector<8x128xf32>
    tpu.vector_store %arg8[%c0_21, %c0_22], %40 {strides = array<i32>} : memref<8x128xf32, #tpu.memory_space<vmem>>, vector<8x128xf32>,
    return
  }
  func.func @transform_0(%arg0: i32) -> (i32, i32) {
    %c0_i32 = arith.constant 0 : i32
    %c0_i32_0 = arith.constant 0 : i32
    return %arg0, %c0_i32 : i32, i32
  }
  func.func @transform_1(%arg0: i32) -> (i32, i32) {
    %c0_i32 = arith.constant 0 : i32
    %c0_i32_0 = arith.constant 0 : i32
    %c0_i32_1 = arith.constant 0 : i32
    return %c0_i32, %c0_i32_0 : i32, i32
  }
  func.func @transform_2(%arg0: i32) -> (i32, i32) {
    %c0_i32 = arith.constant 0 : i32
    %c0_i32_0 = arith.constant 0 : i32
    %c0_i32_1 = arith.constant 0 : i32
    return %c0_i32, %c0_i32_0 : i32, i32
  }
  func.func @transform_3(%arg0: i32) -> (i32, i32) {
    %c0_i32 = arith.constant 0 : i32
    %c0_i32_0 = arith.constant 0 : i32
    %c0_i32_1 = arith.constant 0 : i32
    return %c0_i32, %c0_i32_0 : i32, i32
  }
  func.func @transform_4(%arg0: i32) -> (i32, i32) {
    %c0_i32 = arith.constant 0 : i32
    %c0_i32_0 = arith.constant 0 : i32
    %c0_i32_1 = arith.constant 0 : i32
    return %c0_i32, %c0_i32_0 : i32, i32
  }
  func.func @transform_5(%arg0: i32) -> (i32, i32) {
    %c0_i32 = arith.constant 0 : i32
    %c0_i32_0 = arith.constant 0 : i32
    %c0_i32_1 = arith.constant 0 : i32
    return %c0_i32, %c0_i32_0 : i32, i32
  }
  func.func @transform_6(%arg0: i32) -> (i32, i32) {
    %c0_i32 = arith.constant 0 : i32
    %c0_i32_0 = arith.constant 0 : i32
    %c0_i32_1 = arith.constant 0 : i32
    return %c0_i32, %c0_i32_0 : i32, i32
  }
  func.func @transform_7(%arg0: i32) -> (i32, i32) {
    %c0_i32 = arith.constant 0 : i32
    %c0_i32_0 = arith.constant 0 : i32
    return %arg0, %c0_i32 : i32, i32
  }
}

</mosaic_0001>

<llo_original>
// kernel: tpu_custom_call.1
$region0: #{tpu_custom_call.1}
  #allocation0 [shape = 'u32[]', space=smem, size = 0x4, offset = 0x4, fixed_abs, tag = 'smem constant byte address 0x4 - core index']
  #allocation1 [shape = 'u32[72,128]{1,0:T(1,128)}', space=vmem, size = 0x9000, scoped, tag = 'internal scratch']
  %s0 = inlined_call_operand.hbm [shape: bf16[8,32], index: 0, kind: input, shape index: {}]
  %s1 = inlined_call_operand.hbm [shape: bf16[32,32], index: 1, kind: input, shape index: {}]
  %s2 = inlined_call_operand.vmem [shape: f32[1,32], index: 2, kind: input, shape index: {}]
  %s3 = inlined_call_operand.hbm [shape: bf16[32,32], index: 3, kind: input, shape index: {}]
  %s4 = inlined_call_operand.vmem [shape: f32[1,32], index: 4, kind: input, shape index: {}]
  %s5 = inlined_call_operand.hbm [shape: bf16[32,128], index: 5, kind: input, shape index: {}]
  %s6 = inlined_call_operand.vmem [shape: f32[1,128], index: 6, kind: input, shape index: {}]
  %s7 = inlined_call_operand.hbm [shape: f32[8,128], index: 7, kind: output, shape index: {}]
  %s8 = sld [smem:[#allocation0]]
  $region54: #{tpu_custom_call.1} parent=0
    _
  %s10 = ssub.s32 1, %s8
  %s11 = scalar_select 0, %s10, %s8
  $region1: #{tpu_custom_call.1} parent=0
    #allocation2 [shape = 'u8[2048]{0}', space=vmem, size = 0x800, scoped, tag = 'input window, operand 0, single buffered']
    #allocation3 [shape = 's32[1]{0}', space=sflag, size = 0x4, scoped, tag = 'scoped memory for tpu_custom_call.1']
    #allocation4 [shape = 's32[1]{0}', space=sflag, size = 0x4, scoped, tag = 'scoped memory for tpu_custom_call.1']
    #allocation5 [shape = 'u8[8192]{0}', space=vmem, size = 0x2000, scoped, tag = 'input window, operand 1, single buffered']
    #allocation6 [shape = 's32[1]{0}', space=sflag, size = 0x4, scoped, tag = 'scoped memory for tpu_custom_call.1']
    #allocation7 [shape = 'u8[8192]{0}', space=vmem, size = 0x2000, scoped, tag = 'input window, operand 3, single buffered']
    #allocation8 [shape = 'u8[8192]{0}', space=vmem, size = 0x2000, scoped, tag = 'input window, operand 5, single buffered']
    #allocation9 [shape = 's32[1]{0}', space=sflag, size = 0x4, scoped, tag = 'scoped memory for tpu_custom_call.1']
    #allocation10 [shape = 'u8[4096]{0}', space=vmem, size = 0x1000, scoped, tag = 'output window, operand 0, single buffered']
    %12 = vsyncpa [#allocation3], 0
    %13 = vsyncpa [#allocation6], 0
    %14 = vsyncpa [#allocation9], 0
    %15 = vsyncpa [#allocation4], 0
    // Predicated region
    $region2: #{tpu_custom_call.1} parent=1 // pred_check
      _
    $region3: #{tpu_custom_call.1} parent=1 // pred_check_branch
      %17 = sbr.rel (0) target = $region5
    $region4: #{tpu_custom_call.1} parent=1 // pred_region
      %19 = vsyncadd [#allocation3], 0
      %s21 = sshll.u32 %s0, 4
      %s22 = int_to_ptr.hbm [resolvable:$true] %s21
      %s23 = sshll.u32 [#allocation2], 4
      %s24 = int_to_ptr.vmem [resolvable:$true] %s23
      %26 = dma.hbm_to_vmem [thread:$0]  %s22, 64, %s24, [#allocation3]
    $region5: #{tpu_custom_call.1} parent=1 // pred_fallthru
      _
    // Predicated region
    $region6: #{tpu_custom_call.1} parent=1 // pred_check
      _
    $region7: #{tpu_custom_call.1} parent=1 // pred_check_branch
      %28 = sbr.rel (0) target = $region9
    $region8: #{tpu_custom_call.1} parent=1 // pred_region
      %30 = vsyncadd [#allocation6], 0
      %s31 = sshll.u32 %s1, 4
      %s32 = int_to_ptr.hbm [resolvable:$true] %s31
      %s33 = sshll.u32 [#allocation5], 4
      %s34 = int_to_ptr.vmem [resolvable:$true] %s33
      %39 = dma.hbm_to_vmem [thread:$0]  %s32, 256, %s34, [#allocation6], 64, 64, 4
    $region9: #{tpu_custom_call.1} parent=1 // pred_fallthru
      _
    // Predicated region
    $region10: #{tpu_custom_call.1} parent=1 // pred_check
      _
    $region11: #{tpu_custom_call.1} parent=1 // pred_check_branch
      %41 = sbr.rel (0) target = $region13
    $region12: #{tpu_custom_call.1} parent=1 // pred_region
      _
    $region13: #{tpu_custom_call.1} parent=1 // pred_fallthru
      _
    // Predicated region
    $region14: #{tpu_custom_call.1} parent=1 // pred_check
      _
    $region15: #{tpu_custom_call.1} parent=1 // pred_check_branch
      %43 = sbr.rel (0) target = $region17
    $region16: #{tpu_custom_call.1} parent=1 // pred_region
      %45 = vsyncadd [#allocation6], 0
      %s46 = sshll.u32 %s3, 4
      %s47 = int_to_ptr.hbm [resolvable:$true] %s46
      %s48 = sshll.u32 [#allocation7], 4
      %s49 = int_to_ptr.vmem [resolvable:$true] %s48
      %54 = dma.hbm_to_vmem [thread:$0]  %s47, 256, %s49, [#allocation6], 64, 64, 4
    $region17: #{tpu_custom_call.1} parent=1 // pred_fallthru
      _
    // Predicated region
    $region18: #{tpu_custom_call.1} parent=1 // pred_check
      _
    $region19: #{tpu_custom_call.1} parent=1 // pred_check_branch
      %56 = sbr.rel (0) target = $region21
    $region20: #{tpu_custom_call.1} parent=1 // pred_region
      _
    $region21: #{tpu_custom_call.1} parent=1 // pred_fallthru
      _
    // Predicated region
    $region22: #{tpu_custom_call.1} parent=1 // pred_check
      _
    $region23: #{tpu_custom_call.1} parent=1 // pred_check_branch
      %58 = sbr.rel (0) target = $region25
    $region24: #{tpu_custom_call.1} parent=1 // pred_region
      %60 = vsyncadd [#allocation9], 0
      %s61 = sshll.u32 %s5, 4
      %s62 = int_to_ptr.hbm [resolvable:$true] %s61
      %s63 = sshll.u32 [#allocation8], 4
      %s64 = int_to_ptr.vmem [resolvable:$true] %s63
      %69 = dma.hbm_to_vmem [thread:$0]  %s62, 256, %s64, [#allocation9], 64, 64, 4
    $region25: #{tpu_custom_call.1} parent=1 // pred_fallthru
      _
    // Predicated region
    $region26: #{tpu_custom_call.1} parent=1 // pred_check
      _
    $region27: #{tpu_custom_call.1} parent=1 // pred_check_branch
      %71 = sbr.rel (0) target = $region29
    $region28: #{tpu_custom_call.1} parent=1 // pred_region
      _
    $region29: #{tpu_custom_call.1} parent=1 // pred_fallthru
      _
    // Predicated region
    $region30: #{tpu_custom_call.1} parent=1 // pred_check
      _
    $region31: #{tpu_custom_call.1} parent=1 // pred_check_branch
      %73 = sbr.rel (0) target = $region33
    $region32: #{tpu_custom_call.1} parent=1 // pred_region
      %75 = dma.done [#allocation3], 64
    $region33: #{tpu_custom_call.1} parent=1 // pred_fallthru
      _
    // Predicated region
    $region34: #{tpu_custom_call.1} parent=1 // pred_check
      _
    $region35: #{tpu_custom_call.1} parent=1 // pred_check_branch
      %77 = sbr.rel (0) target = $region37
    $region36: #{tpu_custom_call.1} parent=1 // pred_region
      %79 = dma.done [#allocation6], 256
    $region37: #{tpu_custom_call.1} parent=1 // pred_fallthru
      _
    // Predicated region
    $region38: #{tpu_custom_call.1} parent=1 // pred_check
      _
    $region39: #{tpu_custom_call.1} parent=1 // pred_check_branch
      %81 = sbr.rel (0) target = $region41
    $region40: #{tpu_custom_call.1} parent=1 // pred_region
      %83 = dma.done [#allocation6], 256
    $region41: #{tpu_custom_call.1} parent=1 // pred_fallthru
      _
    // Predicated region
    $region42: #{tpu_custom_call.1} parent=1 // pred_check
      _
    $region43: #{tpu_custom_call.1} parent=1 // pred_check_branch
      %85 = sbr.rel (0) target = $region45
    $region44: #{tpu_custom_call.1} parent=1 // pred_region
      %87 = dma.done [#allocation9], 256
    $region45: #{tpu_custom_call.1} parent=1 // pred_fallthru
      _
    %v89 = vld [vmem:[#allocation2] sm:$0xf]
    %v90 = vld [vmem:[#allocation5] sm:$0xf]
    %v91 = vld [vmem:[#allocation5 + $0x4] sm:$0xf]
    %v92 = vld [vmem:[#allocation5 + $0x8] sm:$0xf]
    %v93 = vld [vmem:[#allocation5 + $0xc] sm:$0xf]
    %v94 = vld [vmem:[%s2] sm:$0x1]
    %v96 = vperm.slane %v94, 0
    %v102 = vunpack.c.l.b16 %v90
    %v103 = vunpack.c.l.b16 %v91
    %v104 = vunpack.c.l.b16 %v92
    %v105 = vunpack.c.l.b16 %v93
    %v106 = vpack.c.b16 %v103, %v102
    %v107 = vpack.c.b16 %v105, %v104
    %vm110 = vcmask 261120
    %v112 = vsel %vm110, %v89, 0
    %114 = vmatpush.bf16.msra.mxu0 0
    %115 = vmatpush.bf16.msra.mxu0 0
    %116 = vmatpush.bf16.msra.mxu0 0
    %117 = vmatpush.bf16.msra.mxu0 0
    %118 = vmatpush.bf16.msra.mxu0 0
    %119 = vmatpush.bf16.msra.mxu0 0
    %120 = vmatpush.bf16.msra.mxu0 %v107
    %121 = vmatpush.bf16.msra.mxu0 %v106
    %122 = vmatmul.bf16.gmra.mxu0 %v112
    %v123 = vpop.f32.mrf.mxu0
    %v124 = vadd.f32 %v96, %v123
    %v125 = vpop.f32.mrf.mxu0
    %126 = vdwg.mxu0
    %v127 = vmax.f32 %v124, 0.0
    %v128 = vpack.c.bf16 %v127, %v127
    %v129 = vld [vmem:[#allocation7] sm:$0xf]
    %v130 = vld [vmem:[#allocation7 + $0x4] sm:$0xf]
    %v131 = vld [vmem:[#allocation7 + $0x8] sm:$0xf]
    %v132 = vld [vmem:[#allocation7 + $0xc] sm:$0xf]
    %v133 = vld [vmem:[%s4] sm:$0x1]
    %v135 = vperm.slane %v133, 0
    %v141 = vunpack.c.l.b16 %v129
    %v142 = vunpack.c.l.b16 %v130
    %v143 = vunpack.c.l.b16 %v131
    %v144 = vunpack.c.l.b16 %v132
    %v145 = vpack.c.b16 %v142, %v141
    %v146 = vpack.c.b16 %v144, %v143
    %v150 = vsel %vm110, %v128, 0
    %152 = vmatpush.bf16.msra.mxu0 0
    %153 = vmatpush.bf16.msra.mxu0 0
    %154 = vmatpush.bf16.msra.mxu0 0
    %155 = vmatpush.bf16.msra.mxu0 0
    %156 = vmatpush.bf16.msra.mxu0 0
    %157 = vmatpush.bf16.msra.mxu0 0
    %158 = vmatpush.bf16.msra.mxu0 %v146
    %159 = vmatpush.bf16.msra.mxu0 %v145
    %160 = vmatmul.bf16.gmra.mxu0 %v150
    %v161 = vpop.f32.mrf.mxu0
    %v162 = vadd.f32 %v135, %v161
    %v163 = vpop.f32.mrf.mxu0
    %164 = vdwg.mxu0
    %v165 = vmax.f32 %v162, 0.0
    %v166 = vpack.c.bf16 %v165, %v165
    %v167 = vld [vmem:[#allocation8] sm:$0xf]
    %v168 = vld [vmem:[#allocation8 + $0x4] sm:$0xf]
    %v169 = vld [vmem:[#allocation8 + $0x8] sm:$0xf]
    %v170 = vld [vmem:[#allocation8 + $0xc] sm:$0xf]
    %v171 = vld [vmem:[%s6] sm:$0x1]
    %v173 = vperm.slane %v171, 0
    %v179 = vunpack.c.l.b16 %v167
    %v180 = vunpack.c.l.b16 %v168
    %v181 = vunpack.c.l.b16 %v169
    %v182 = vunpack.c.l.b16 %v170
    %v183 = vpack.c.b16 %v180, %v179
    %v184 = vpack.c.b16 %v182, %v181
    %v188 = vsel %vm110, %v166, 0
    %190 = vmatpush.bf16.msra.mxu0 0
    %191 = vmatpush.bf16.msra.mxu0 0
    %192 = vmatpush.bf16.msra.mxu0 0
    %193 = vmatpush.bf16.msra.mxu0 0
    %194 = vmatpush.bf16.msra.mxu0 0
    %195 = vmatpush.bf16.msra.mxu0 0
    %196 = vmatpush.bf16.msra.mxu0 %v184
    %197 = vmatpush.bf16.msra.mxu0 %v183
    %198 = vmatmul.bf16.gmra.mxu0 %v188
    %v199 = vpop.f32.mrf.mxu0
    %v200 = vadd.f32 %v173, %v199
    %v201 = vpop.f32.mrf.mxu0
    %202 = vdwg.mxu0
    %v203 = vmax.f32 %v200, 0.0
    %v204 = vand.u32 2147483647, %v200
    %v205 = vsub.f32 0.0, %v204
    %v206 = vmul.f32 %v205, 1.442695
    %v207 = vpow.pop %v206
    %v208 = vadd.f32 %v207, 1.0
    %v209 = vlog2.pop %v208
    %v210 = vmul.f32 %v209, 0.6931472
    %v211 = vmul.f32 -0.5, %v207
    %v212 = vadd.f32 %v211, 1.0
    %v213 = vmul.f32 %v212, %v207
    %v214 = vand.u32 2147483647, %v207
    %vm215 = vcmp.lt.f32.partialorder %v214, 0.0004427343
    %v216 = vsel %vm215, %v213, %v210
    %v217 = vadd.f32 %v203, %v216
    %v218 = vmax.f32 %v217, 0.01
    %v219 = vmin.f32 %v218, 20.0
    %v220 = vlaneseq
    %v221 = vand.u32 %v220, 127
    %vm222 = vcmp.ge.s32.totalorder %v221, 16
    %vm223 = vcmp.lt.s32.totalorder %v221, 32
    %vm224 = vmand %vm222, %vm223
    %v225 = vsel %vm224, %v219, %v200
    %226 = vst [vmem:[#allocation10] sm:$0xff] %v225
    // Predicated region
    $region46: #{tpu_custom_call.1} parent=1 // pred_check
      _
    $region47: #{tpu_custom_call.1} parent=1 // pred_check_branch
      %228 = sbr.rel (0) target = $region49
    $region48: #{tpu_custom_call.1} parent=1 // pred_region
      %230 = vsyncadd [#allocation4], 0
      %s232 = sshll.u32 [#allocation10], 4
      %s233 = int_to_ptr.vmem [resolvable:$true] %s232
      %s234 = sshll.u32 %s7, 4
      %s235 = int_to_ptr.hbm [resolvable:$true] %s234
      %237 = dma.vmem_to_hbm [thread:$0]  %s233, 128, %s235, [#allocation4]
    $region49: #{tpu_custom_call.1} parent=1 // pred_fallthru
      _
    // Predicated region
    $region50: #{tpu_custom_call.1} parent=1 // pred_check
      _
    $region51: #{tpu_custom_call.1} parent=1 // pred_check_branch
      %239 = sbr.rel (0) target = $region53
    $region52: #{tpu_custom_call.1} parent=1 // pred_region
      %241 = dma.done [#allocation4], 128
    $region53: #{tpu_custom_call.1} parent=1 // pred_fallthru
      _
    %242 = vsyncpa [#allocation3], 1
    %243 = vsyncpa [#allocation6], 1
    %244 = vsyncpa [#allocation9], 1
    %245 = vsyncpa [#allocation4], 1

</llo_original>
